<compile_context>
chip_gen: v6e
topology: v6e:2x2x1
jax: 0.10.0
libtpu: 0.0.40
codegen_flags: <defaults>
</compile_context>

<pallas_src>
import math

import jax
import jax.numpy as jnp
from jax import lax
from jax.experimental import pallas as pl
from jax.experimental.pallas import tpu as pltpu

CACHE_DTYPE = jnp.bfloat16
OUT_DTYPE = jnp.bfloat16          # downstream consumer accepts bf16 activations
NEG_INF = -1e30                   # mask constant; softmax math kept in f32


def _round_up(x, m):
    return ((x + m - 1) // m) * m


def _tpu_limits():
    """Generation-aware KV-tile cap and VMEM scoped limit (v7x: 64 MiB/TC)."""
    vmem_cap = 64 * 1024 * 1024
    try:
        info = pltpu.get_tpu_info()
        vmem_cap = int(getattr(info, "vmem_capacity_bytes", vmem_cap))
    except Exception:
        pass
    if vmem_cap >= 96 * 1024 * 1024:          # v5e / v6e (128 MiB VMEM)
        return 4096, 64 * 1024 * 1024
    return 2048, 40 * 1024 * 1024             # v7x (64 MiB VMEM)


MAX_KV_TILE, VMEM_LIMIT_BYTES = _tpu_limits()


def _kv_tiling(Sc, B, H):
    """KV-cache tile length (rows) and tile count; keeps 2x double-buffered
    (B, TK, 2H) bf16 tiles within ~1/4 of the scoped VMEM limit."""
    row_bytes = 2 * B * 2 * H * jnp.dtype(CACHE_DTYPE).itemsize
    cap = max(512, min(MAX_KV_TILE, (VMEM_LIMIT_BYTES // 4) // max(row_bytes, 1)))
    cap = max(8, (cap // 8) * 8)
    if Sc <= cap:
        return _round_up(Sc, 8), 1            # single tile, usually no ragged mask
    return cap, -(-Sc // cap)


# ----------------------------------------------------------------------------
# Kernel bodies
# ----------------------------------------------------------------------------
def _make_nocache_kernel(B, S, H):
    """Single-shot causal attention over the new block (no KV cache); one grid step,
    batch folded into M of both GEMMs."""

    def kernel(src_ref, wqkv_ref, wo_ref, out_ref, kvn_ref):
        src = src_ref[...].reshape(B * S, H).astype(jnp.bfloat16)
        qkv = jnp.dot(src, wqkv_ref[...],
                      preferred_element_type=jnp.float32)          # [B*S, 3H]
        q = qkv[:, :H].astype(jnp.bfloat16).reshape(B, S, H)        # scale folded in
        k = qkv[:, H:2 * H].astype(jnp.bfloat16).reshape(B, S, H)
        v = qkv[:, 2 * H:].astype(jnp.bfloat16).reshape(B, S, H)
        kvn_ref[:, :, :H] = k.astype(kvn_ref.dtype)                  # lane-aligned halves
        kvn_ref[:, :, H:] = v.astype(kvn_ref.dtype)

        s_n = jnp.einsum('bqh,bkh->bqk', q, k,
                         preferred_element_type=jnp.float32)        # [B, S, S]
        row = lax.broadcasted_iota(jnp.int32, (B, S, S), 1)
        col = lax.broadcasted_iota(jnp.int32, (B, S, S), 2)
        s_n = jnp.where(col <= row, s_n, NEG_INF)

        m = s_n.max(axis=-1, keepdims=True)
        p = jnp.exp(s_n - m)
        l = p.sum(axis=-1, keepdims=True)
        att = jnp.einsum('bqk,bkh->bqh', p.astype(jnp.bfloat16), v,
                         preferred_element_type=jnp.float32)
        att = att * pl.reciprocal(l, approx=True)
        out = jnp.dot(att.reshape(B * S, H).astype(jnp.bfloat16), wo_ref[...],
                      preferred_element_type=jnp.float32)
        out_ref[...] = out.reshape(B, S, H).astype(out_ref.dtype)

    return kernel


def _make_cached_kernel(B, S, H, Sc, TK, KT):
    """Flash-style cached causal attention; grid axis 0 tiles the (padded) cache.
    The new packed KV block is written in place into the aliased HBM buffer."""
    ragged = (KT * TK) != Sc

    def kernel(src_ref, kvc_ref, wqkv_ref, wo_ref, out_ref, kvbuf_ref,
               q_s, kvn_s, m_s, l_s, acc_s, sem):
        kt = pl.program_id(0)

        @pl.when(kt == 0)
        def _init():
            src = src_ref[...].reshape(B * S, H).astype(jnp.bfloat16)
            qkv = jnp.dot(src, wqkv_ref[...],
                          preferred_element_type=jnp.float32)       # [B*S, 3H], M=B*S
            q = qkv[:, :H].astype(jnp.bfloat16).reshape(B, S, H)
            k = qkv[:, H:2 * H].astype(jnp.bfloat16).reshape(B, S, H)
            v = qkv[:, 2 * H:].astype(jnp.bfloat16).reshape(B, S, H)
            q_s[...] = q
            kvn_s[:, :, :H] = k                                      # lane-aligned halves
            kvn_s[:, :, H:] = v

            # Causal block over the new tokens (processed once).
            s_n = jnp.einsum('bqh,bkh->bqk', q, k,
                             preferred_element_type=jnp.float32)
            row = lax.broadcasted_iota(jnp.int32, (B, S, S), 1)
            col = lax.broadcasted_iota(jnp.int32, (B, S, S), 2)
            s_n = jnp.where(col <= row, s_n, NEG_INF)
            m0 = s_n.max(axis=-1, keepdims=True)
            p_n = jnp.exp(s_n - m0)
            m_s[...] = m0
            l_s[...] = p_n.sum(axis=-1, keepdims=True)
            acc_s[...] = jnp.einsum('bqk,bkh->bqh', p_n.astype(jnp.bfloat16), v,
                                    preferred_element_type=jnp.float32)

        # Online-softmax update with this cache tile (cache is fully visible).
        kv_tile = kvc_ref[...]                                       # [B, TK, 2H] bf16
        kc = kv_tile[:, :, :H]
        vc = kv_tile[:, :, H:]
        s_c = jnp.einsum('bqh,bkh->bqk', q_s[...], kc,
                         preferred_element_type=jnp.float32)         # [B, S, TK] f32
        if ragged:
            # Pad rows are zero-filled (finite) by construction, so only the score
            # mask is needed; with large TK this runs on very few tiles.
            valid = (kt * TK +
                     lax.broadcasted_iota(jnp.int32, (B, S, TK), 2)) < Sc
            s_c = jnp.where(valid, s_c, NEG_INF)

        m_prev = m_s[...]
        m_new = jnp.maximum(m_prev, s_c.max(axis=-1, keepdims=True))
        alpha = jnp.exp(m_prev - m_new)
        p_c = jnp.exp(s_c - m_new)
        l_s[...] = alpha * l_s[...] + p_c.sum(axis=-1, keepdims=True)
        acc_s[...] = alpha * acc_s[...] + jnp.einsum(
            'bqk,bkh->bqh', p_c.astype(jnp.bfloat16), vc,
            preferred_element_type=jnp.float32)
        m_s[...] = m_new

        @pl.when(kt == KT - 1)
        def _finalize():
            att = acc_s[...] * pl.reciprocal(l_s[...], approx=True)
            out = jnp.dot(att.reshape(B * S, H).astype(jnp.bfloat16), wo_ref[...],
                          preferred_element_type=jnp.float32)
            out_ref[...] = out.reshape(B, S, H).astype(out_ref.dtype)
            # In-place write of the new packed KV block into the aliased cache buffer
            # (rows [Sc, Sc+S) are disjoint from the zero-padded cache-read region
            # content that matters, so ordering vs. the tile prefetches is benign).
            cp = pltpu.make_async_copy(kvn_s,
                                       kvbuf_ref.at[:, pl.ds(Sc, S), :],
                                       sem.at[0])
            cp.start()
            cp.wait()

    return kernel


# ----------------------------------------------------------------------------
# pallas_call wrappers
# ----------------------------------------------------------------------------
@jax.jit
def _attention_forward_nocache(src, wqkv, wo):
    B, S, H = src.shape
    kernel = _make_nocache_kernel(B, S, H)

    cost = pl.CostEstimate(
        flops=2 * B * S * H * 3 * H + 4 * B * S * S * H + 2 * B * S * H * H,
        transcendentals=B * S * S,
        bytes_accessed=(src.size * src.dtype.itemsize
                        + wqkv.size * wqkv.dtype.itemsize
                        + wo.size * wo.dtype.itemsize
                        + B * S * H * jnp.dtype(OUT_DTYPE).itemsize
                        + B * S * 2 * H * jnp.dtype(CACHE_DTYPE).itemsize))

    return pl.pallas_call(
        kernel,
        out_shape=(jax.ShapeDtypeStruct((B, S, H), OUT_DTYPE),
                   jax.ShapeDtypeStruct((B, S, 2 * H), CACHE_DTYPE)),
        grid_spec=pltpu.PrefetchScalarGridSpec(
            num_scalar_prefetch=0,
            grid=(1,),
            in_specs=[pl.BlockSpec((B, S, H), lambda i: (0, 0, 0)),
                      pl.BlockSpec((H, 3 * H), lambda i: (0, 0)),
                      pl.BlockSpec((H, H), lambda i: (0, 0))],
            out_specs=(pl.BlockSpec((B, S, H), lambda i: (0, 0, 0)),
                       pl.BlockSpec((B, S, 2 * H), lambda i: (0, 0, 0)))),
        compiler_params=pltpu.CompilerParams(
            dimension_semantics=("arbitrary",),
            vmem_limit_bytes=VMEM_LIMIT_BYTES),
        cost_estimate=cost,
    )(src, wqkv, wo)


@jax.jit
def _attention_forward_cached(src, cache_kv, wqkv, wo):
    B, S, H = src.shape
    Sc = cache_kv.shape[1]
    TK, KT = _kv_tiling(Sc, B, H)
    Spad = TK * KT
    Cbuf = Spad + S

    # Fixed-capacity KV buffer: [cache | zero pad | slot for the new block].
    # The pallas output aliases this buffer, so the cache region is never re-copied;
    # only the new S-row block is DMA'd in place at row offset Sc.
    # TODO(synk): a persistent, rotated cache buffer across recurrent steps would also
    # remove this prefix copy, but requires relaxing the wrapper's [B, mem_len, 2H]
    # memory contract.
    kv_buf = jnp.concatenate(
        [cache_kv.astype(CACHE_DTYPE),
         jnp.zeros((B, Cbuf - Sc, 2 * H), CACHE_DTYPE)], axis=1)

    kernel = _make_cached_kernel(B, S, H, Sc, TK, KT)

    cost = pl.CostEstimate(
        flops=(2 * B * S * H * 3 * H + 4 * B * S * (S + Spad) * H
               + 2 * B * S * H * H),
        transcendentals=B * S * (S + Spad),
        bytes_accessed=(src.size * src.dtype.itemsize
                        + B * Spad * 2 * H * jnp.dtype(CACHE_DTYPE).itemsize
                        + wqkv.size * wqkv.dtype.itemsize
                        + wo.size * wo.dtype.itemsize
                        + B * S * H * jnp.dtype(OUT_DTYPE).itemsize
                        + B * S * 2 * H * jnp.dtype(CACHE_DTYPE).itemsize))

    # TODO(synk): for production B==1 on v7x, split the KT axis across the two
    # TensorCores with per-core (m, l, acc) partials and a combine step.
    # TODO(synk): optionally quantize the KV cache stream (fp8 on v7x / int8 on
    # v5e,v6e) to halve the dominant HBM read.
    out, new_buf = pl.pallas_call(
        kernel,
        out_shape=(jax.ShapeDtypeStruct((B, S, H), OUT_DTYPE),
                   jax.ShapeDtypeStruct((B, Cbuf, 2 * H), CACHE_DTYPE)),
        grid_spec=pltpu.PrefetchScalarGridSpec(
            num_scalar_prefetch=0,
            grid=(KT,),
            in_specs=[pl.BlockSpec((B, S, H), lambda kt: (0, 0, 0)),
                      pl.BlockSpec((B, TK, 2 * H), lambda kt: (0, kt, 0)),
                      pl.BlockSpec((H, 3 * H), lambda kt: (0, 0)),
                      pl.BlockSpec((H, H), lambda kt: (0, 0))],
            out_specs=(pl.BlockSpec((B, S, H), lambda kt: (0, 0, 0)),
                       pl.BlockSpec(memory_space=pl.ANY)),
            scratch_shapes=[
                pltpu.VMEM((B, S, H), jnp.bfloat16),     # q (scale folded)
                pltpu.VMEM((B, S, 2 * H), CACHE_DTYPE),  # packed new KV block
                pltpu.VMEM((B, S, 1), jnp.float32),      # running max m
                pltpu.VMEM((B, S, 1), jnp.float32),      # running denom l
                pltpu.VMEM((B, S, H), jnp.float32),      # f32 accumulator
                pltpu.SemaphoreType.DMA((1,)),           # new-KV writeback
            ]),
        input_output_aliases={1: 1},     # kv_buf -> new-cache output (in place)
        compiler_params=pltpu.CompilerParams(
            dimension_semantics=("arbitrary",),
            vmem_limit_bytes=VMEM_LIMIT_BYTES),
        cost_estimate=cost,
    )(src, kv_buf, wqkv, wo)

    # When the cache length is already tile-aligned (the steady state here),
    # the aliased buffer IS the new cache and no extra copy happens at all.
    new_cache = new_buf if Cbuf == Sc + S else new_buf[:, :Sc + S]
    return out, new_cache


# ----------------------------------------------------------------------------
# Temporal module (single-layer cached causal attention) — uses the kernels.
# ----------------------------------------------------------------------------
class CachedAttentionTemporalModule:
    """Cache format: list with one packed KV tensor [B, S_cache, 2*H] (bf16)."""

    def __init__(self, hidden, key):
        self.hidden = hidden
        k1, k2, k3, k4 = jax.random.split(key, 4)
        s = 1.0 / math.sqrt(hidden)
        wq = jax.random.normal(k1, (hidden, hidden), jnp.float32) * s
        wk = jax.random.normal(k2, (hidden, hidden), jnp.float32) * s
        wv = jax.random.normal(k3, (hidden, hidden), jnp.float32) * s
        wo = jax.random.normal(k4, (hidden, hidden), jnp.float32) * s
        scale = 1.0 / math.sqrt(hidden)
        # Fused QKV weight; attention scale folded into the Q columns once here.
        self.wqkv = jnp.concatenate([wq * scale, wk, wv],
                                    axis=1).astype(jnp.bfloat16)
        self.wo = wo.astype(jnp.bfloat16)

    def forward(self, src, cache=None, need_cache=True, checkpoints_density=-1):
        del checkpoints_density  # TODO(synk): no gradient checkpointing (inference kernel)
        if cache is not None:
            out, new_kv = _attention_forward_cached(src, cache[0],
                                                    self.wqkv, self.wo)
        else:
            out, new_kv = _attention_forward_nocache(src, self.wqkv, self.wo)
        new_cache = [new_kv] if need_cache else None
        return out, new_cache


# ----------------------------------------------------------------------------
# BlockRecurrentWrapper — faithful port of the PyTorch wrapper semantics.
# ----------------------------------------------------------------------------
class BlockRecurrentWrapper:
    def __init__(self, temporal_module, memory_length, memory_type='kv'):
        self.reset()
        self.temporal_module = temporal_module
        self.mem_len = memory_length
        self.memory_type = memory_type.lower()

    def reset(self):
        self.memory = None

    def merge_memory_in_cache(self, cache):
        if self.memory_type == 'kv':
            if cache is not None and self.memory is not None:
                return [jnp.concatenate((mem, ca), axis=1)
                        for mem, ca in zip(self.memory, cache)]
            elif self.memory is not None:
                return self.memory
            elif cache is not None:
                return cache
            return None
        elif self.memory_type == 'mem':
            return cache if cache is not None else self.memory

    def update_memory_cache(self, cache):
        if self.memory_type == 'kv':
            if cache is not None:
                self.memory = [c[:, -self.mem_len:] for c in cache]
            else:
                self.memory = None
            return None
        elif self.memory_type == 'mem':
            # TODO(synk): 'mem' memory type needs a temporal module with
            # nested-tuple caches; only 'kv' is exercised here.
            self.memory = [tuple(lt for lt in l_cache) for l_cache in cache]
            return cache
        raise Exception(f'No such memory type: {self.memory_type}')

    def update_cache_only(self, cache):
        if self.memory_type == 'kv':
            if self.memory is None:
                return cache
            new_cache = []
            for m, c in zip(self.memory, cache):
                m_len = m.shape[1]
                # TODO(synk): faithful to the original PyTorch (`c[m_len:]`, a dim-0
                # slice); almost certainly an upstream bug but kept for parity.
                new_cache.append(c[m_len:])
            return new_cache
        elif self.memory_type == 'mem':
            return cache
        raise Exception(f'No such memory type: {self.memory_type}')

    def forward(self, src, cache=None, need_cache=False, verbose=True,
                checkpoints_density=-1, update_memory=True):
        output, new_cache = self.temporal_module.forward(
            src, cache=self.merge_memory_in_cache(cache), need_cache=True,
            checkpoints_density=checkpoints_density)
        if update_memory:
            new_cache = self.update_memory_cache(new_cache)
        elif need_cache:
            new_cache = self.update_cache_only(new_cache)
        else:
            new_cache = None
        return (output, new_cache)


# ----------------------------------------------------------------------------
# Pure-JAX reference (same bf16 operand rounding) for a loose numerics check.
# ----------------------------------------------------------------------------
def _reference_attention(src, kv_cache, wqkv, wo):
    H = src.shape[-1]
    S = src.shape[1]
    src32 = src.astype(jnp.bfloat16).astype(jnp.float32)
    qkv = src32 @ wqkv.astype(jnp.float32)
    q = qkv[..., :H].astype(jnp.bfloat16).astype(jnp.float32)
    k = qkv[..., H:2 * H].astype(jnp.bfloat16).astype(jnp.float32)
    v = qkv[..., 2 * H:].astype(jnp.bfloat16).astype(jnp.float32)
    if kv_cache is not None:
        kc = kv_cache[..., :H].astype(jnp.float32)
        vc = kv_cache[..., H:].astype(jnp.float32)
        k_all = jnp.concatenate([kc, k], axis=1)
        v_all = jnp.concatenate([vc, v], axis=1)
        Sc = kv_cache.shape[1]
    else:
        k_all, v_all, Sc = k, v, 0
    scores = jnp.einsum('bsh,bth->bst', q, k_all)
    kv_pos = jnp.arange(Sc + S)[None, :]
    q_pos = jnp.arange(S)[:, None] + Sc
    scores = jnp.where(kv_pos <= q_pos, scores, NEG_INF)
    p = jax.nn.softmax(scores, axis=-1)
    att = jnp.einsum('bst,bth->bsh', p, v_all)
    return att @ wo.astype(jnp.float32)


# ----------------------------------------------------------------------------
# Demo
# ----------------------------------------------------------------------------
if __name__ == "__main__":
    B, S, H = 2, 16, 128        # H lane-aligned (multiple of 128)
    MEM_LEN = 16

    key = jax.random.PRNGKey(0)
    k_mod, k_x1, k_x2, k_x3 = jax.random.split(key, 4)

    temporal = CachedAttentionTemporalModule(H, k_mod)
    wrapper = BlockRecurrentWrapper(temporal, memory_length=MEM_LEN,
                                    memory_type='kv')

    src1 = jax.random.normal(k_x1, (B, S, H), jnp.float32)
    src2 = jax.random.normal(k_x2, (B, S, H), jnp.float32)
    src3 = jax.random.normal(k_x3, (B, S, H), jnp.float32)

    # Block 1: no memory yet (single-step batched kernel); memory is updated.
    out1, cache1 = wrapper.forward(src1, update_memory=True)
    mem1 = wrapper.memory[0]
    # Blocks 2 & 3: attend over the stored memory via the aliased rolling buffer.
    out2, cache2 = wrapper.forward(src2, update_memory=True)
    mem2 = wrapper.memory[0]
    out3, cache3 = wrapper.forward(src3, update_memory=True)

    jax.block_until_ready(out1)
    jax.block_until_ready(out2)
    jax.block_until_ready(out3)
    jax.block_until_ready(wrapper.memory[0])

    assert out1.shape == (B, S, H) and out2.shape == (B, S, H) and out3.shape == (B, S, H)
    assert wrapper.memory[0].shape == (B, MEM_LEN, 2 * H)
    assert wrapper.memory[0].dtype == CACHE_DTYPE
    assert cache1 is None and cache2 is None and cache3 is None
    assert bool(jnp.all(jnp.isfinite(out1.astype(jnp.float32))))
    assert bool(jnp.all(jnp.isfinite(out2.astype(jnp.float32))))
    assert bool(jnp.all(jnp.isfinite(out3.astype(jnp.float32))))

    # Loose numerics check against the pure-JAX reference (bf16 MXU operands,
    # bf16 kernel output, EUP approx reciprocal).
    ref1 = _reference_attention(src1, None, temporal.wqkv, temporal.wo)
    ref2 = _reference_attention(src2, mem1, temporal.wqkv, temporal.wo)
    ref3 = _reference_attention(src3, mem2, temporal.wqkv, temporal.wo)
    err1 = float(jnp.max(jnp.abs(out1.astype(jnp.float32) - ref1)))
    err2 = float(jnp.max(jnp.abs(out2.astype(jnp.float32) - ref2)))
    err3 = float(jnp.max(jnp.abs(out3.astype(jnp.float32) - ref3)))
    assert err1 < 0.25 and err2 < 0.25 and err3 < 0.25, (err1, err2, err3)

    print("KERNEL_OK")
</pallas_src>

<mosaic_0001>
module attributes {stable_mosaic.version = 11 : i64} {
  func.func @kernel(%arg0: i32, %arg1: memref<2x16x128xf32, #tpu.memory_space<vmem>>, %arg2: memref<128x384xbf16, #tpu.memory_space<vmem>>, %arg3: memref<128x128xbf16, #tpu.memory_space<vmem>>, %arg4: memref<2x16x128xbf16, #tpu.memory_space<vmem>>, %arg5: memref<2x16x256xbf16, #tpu.memory_space<vmem>>) attributes {dimension_semantics = [#tpu.dimension_semantics<arbitrary>], iteration_bounds = array<i64: 1>, scalar_prefetch = 0 : i64, scratch_operands = 0 : i64, tpu.core_type = #tpu.core_type<tc>, window_params = [{pipeline_mode = #tpu.pipeline_mode<synchronous>, transform_indices = @transform_0, window_bounds = array<i64: 2, 16, 128>}, {pipeline_mode = #tpu.pipeline_mode<synchronous>, transform_indices = @transform_1, window_bounds = array<i64: 128, 384>}, {pipeline_mode = #tpu.pipeline_mode<synchronous>, transform_indices = @transform_2, window_bounds = array<i64: 128, 128>}, {pipeline_mode = #tpu.pipeline_mode<synchronous>, transform_indices = @transform_3, window_bounds = array<i64: 2, 16, 128>}, {pipeline_mode = #tpu.pipeline_mode<synchronous>, transform_indices = @transform_4, window_bounds = array<i64: 2, 16, 256>}]} {
    %c0 = arith.constant 0 : index
    %c0_0 = arith.constant 0 : index
    %c0_1 = arith.constant 0 : index
    %0 = vector.load %arg1[%c0, %c0_0, %c0_1] : memref<2x16x128xf32, #tpu.memory_space<vmem>>, vector<2x16x128xf32>
    %1 = vector.shape_cast %0 : vector<2x16x128xf32> to vector<32x128xf32>
    %2 = arith.truncf %1 : vector<32x128xf32> to vector<32x128xbf16>
    %c0_2 = arith.constant 0 : index
    %c0_3 = arith.constant 0 : index
    %3 = vector.load %arg2[%c0_2, %c0_3] : memref<128x384xbf16, #tpu.memory_space<vmem>>, vector<128x384xbf16>
    %cst = arith.constant dense<0.000000e+00> : vector<32x384xf32>
    %4 = tpu.matmul %2, %3, %cst {dimension_numbers = #tpu.dot_dimension_numbers<[1], [0], [0], [1], [0, 0, 1, 1], [], []>} : vector<32x128xbf16>, vector<128x384xbf16>, vector<32x384xf32> -> vector<32x384xf32>
    %5 = vector.extract_strided_slice %4 {offsets = [0, 0], sizes = [32, 128], strides = [1, 1]} : vector<32x384xf32> to vector<32x128xf32>
    %6 = arith.truncf %5 : vector<32x128xf32> to vector<32x128xbf16>
    %7 = vector.shape_cast %6 : vector<32x128xbf16> to vector<2x16x128xbf16>
    %8 = vector.extract_strided_slice %4 {offsets = [0, 128], sizes = [32, 128], strides = [1, 1]} : vector<32x384xf32> to vector<32x128xf32>
    %9 = arith.truncf %8 : vector<32x128xf32> to vector<32x128xbf16>
    %10 = vector.shape_cast %9 : vector<32x128xbf16> to vector<2x16x128xbf16>
    %11 = vector.extract_strided_slice %4 {offsets = [0, 256], sizes = [32, 128], strides = [1, 1]} : vector<32x384xf32> to vector<32x128xf32>
    %12 = arith.truncf %11 : vector<32x128xf32> to vector<32x128xbf16>
    %13 = vector.shape_cast %12 : vector<32x128xbf16> to vector<2x16x128xbf16>
    %c0_4 = arith.constant 0 : index
    %c0_5 = arith.constant 0 : index
    %c0_6 = arith.constant 0 : index
    %14 = vector.load %arg5[%c0_4, %c0_5, %c0_6] : memref<2x16x256xbf16, #tpu.memory_space<vmem>>, vector<2x16x128xbf16>
    tpu.vector_store %arg5[%c0_4, %c0_5, %c0_6], %10 {strides = array<i32>} : memref<2x16x256xbf16, #tpu.memory_space<vmem>>, vector<2x16x128xbf16>,
    %c0_7 = arith.constant 0 : index
    %c0_8 = arith.constant 0 : index
    %c128 = arith.constant 128 : index
    %15 = vector.load %arg5[%c0_7, %c0_8, %c128] : memref<2x16x256xbf16, #tpu.memory_space<vmem>>, vector<2x16x128xbf16>
    tpu.vector_store %arg5[%c0_7, %c0_8, %c128], %13 {strides = array<i32>} : memref<2x16x256xbf16, #tpu.memory_space<vmem>>, vector<2x16x128xbf16>,
    "tpu.trace_start"() <{level = 10 : i32, message = "bqh,bkh->bqk"}> : () -> ()
    %cst_9 = arith.constant dense<0.000000e+00> : vector<2x16x16xf32>
    %16 = tpu.matmul %7, %10, %cst_9 {dimension_numbers = #tpu.dot_dimension_numbers<[2], [2], [1], [1], [0, 0, 0, 1, 1, 1], [0], [0]>} : vector<2x16x128xbf16>, vector<2x16x128xbf16>, vector<2x16x16xf32> -> vector<2x16x16xf32>
    "tpu.trace_stop"() : () -> ()
    %17 = tpu.iota {dimensions = array<i32: 1>} : vector<2x16x16xi32>
    %18 = tpu.iota {dimensions = array<i32: 2>} : vector<2x16x16xi32>
    %19 = arith.cmpi sle, %18, %17 : vector<2x16x16xi32>
    %cst_10 = arith.constant -1.000000e+30 : f32
    %20 = vector.broadcast %cst_10 : f32 to vector<2x16x16xf32>
    %21 = arith.select %19, %16, %20 : vector<2x16x16xi1>, vector<2x16x16xf32>
    %cst_11 = arith.constant dense<0xFF800000> : vector<2x16xf32>
    %22 = vector.multi_reduction <maximumf>, %21, %cst_11 [2] : vector<2x16x16xf32> to vector<2x16xf32>
    %23 = vector.shape_cast %22 : vector<2x16xf32> to vector<2x16x1xf32>
    %24 = vector.broadcast %23 : vector<2x16x1xf32> to vector<2x16x16xf32>
    %25 = arith.subf %21, %24 : vector<2x16x16xf32>
    %26 = math.exp %25 : vector<2x16x16xf32>
    %cst_12 = arith.constant dense<0.000000e+00> : vector<2x16xf32>
    %27 = vector.multi_reduction <add>, %26, %cst_12 [2] : vector<2x16x16xf32> to vector<2x16xf32>
    %28 = vector.shape_cast %27 : vector<2x16xf32> to vector<2x16x1xf32>
    %29 = arith.truncf %26 : vector<2x16x16xf32> to vector<2x16x16xbf16>
    "tpu.trace_start"() <{level = 10 : i32, message = "bqk,bkh->bqh"}> : () -> ()
    %cst_13 = arith.constant dense<0.000000e+00> : vector<2x16x128xf32>
    %30 = tpu.matmul %29, %13, %cst_13 {dimension_numbers = #tpu.dot_dimension_numbers<[2], [1], [1], [2], [0, 0, 0, 1, 1, 2], [0], [0]>} : vector<2x16x16xbf16>, vector<2x16x128xbf16>, vector<2x16x128xf32> -> vector<2x16x128xf32>
    "tpu.trace_stop"() : () -> ()
    %31 = tpu.reciprocal %28 {approx = true} : vector<2x16x1xf32> -> vector<2x16x1xf32>
    %32 = vector.broadcast %31 : vector<2x16x1xf32> to vector<2x16x128xf32>
    %33 = arith.mulf %30, %32 : vector<2x16x128xf32>
    %34 = vector.shape_cast %33 : vector<2x16x128xf32> to vector<32x128xf32>
    %35 = arith.truncf %34 : vector<32x128xf32> to vector<32x128xbf16>
    %c0_14 = arith.constant 0 : index
    %c0_15 = arith.constant 0 : index
    %36 = vector.load %arg3[%c0_14, %c0_15] : memref<128x128xbf16, #tpu.memory_space<vmem>>, vector<128x128xbf16>
    %cst_16 = arith.constant dense<0.000000e+00> : vector<32x128xf32>
    %37 = tpu.matmul %35, %36, %cst_16 {dimension_numbers = #tpu.dot_dimension_numbers<[1], [0], [0], [1], [0, 0, 1, 1], [], []>} : vector<32x128xbf16>, vector<128x128xbf16>, vector<32x128xf32> -> vector<32x128xf32>
    %38 = vector.shape_cast %37 : vector<32x128xf32> to vector<2x16x128xf32>
    %39 = arith.truncf %38 : vector<2x16x128xf32> to vector<2x16x128xbf16>
    %c0_17 = arith.constant 0 : index
    %c0_18 = arith.constant 0 : index
    %c0_19 = arith.constant 0 : index
    %40 = vector.load %arg4[%c0_17, %c0_18, %c0_19] : memref<2x16x128xbf16, #tpu.memory_space<vmem>>, vector<2x16x128xbf16>
    tpu.vector_store %arg4[%c0_17, %c0_18, %c0_19], %39 {strides = array<i32>} : memref<2x16x128xbf16, #tpu.memory_space<vmem>>, vector<2x16x128xbf16>,
    return
  }
  func.func @transform_0(%arg0: i32) -> (i32, i32, i32) {
    %c0_i32 = arith.constant 0 : i32
    %c0_i32_0 = arith.constant 0 : i32
    %c0_i32_1 = arith.constant 0 : i32
    %c0_i32_2 = arith.constant 0 : i32
    return %c0_i32, %c0_i32_0, %c0_i32_1 : i32, i32, i32
  }
  func.func @transform_1(%arg0: i32) -> (i32, i32) {
    %c0_i32 = arith.constant 0 : i32
    %c0_i32_0 = arith.constant 0 : i32
    %c0_i32_1 = arith.constant 0 : i32
    return %c0_i32, %c0_i32_0 : i32, i32
  }
  func.func @transform_2(%arg0: i32) -> (i32, i32) {
    %c0_i32 = arith.constant 0 : i32
    %c0_i32_0 = arith.constant 0 : i32
    %c0_i32_1 = arith.constant 0 : i32
    return %c0_i32, %c0_i32_0 : i32, i32
  }
  func.func @transform_3(%arg0: i32) -> (i32, i32, i32) {
    %c0_i32 = arith.constant 0 : i32
    %c0_i32_0 = arith.constant 0 : i32
    %c0_i32_1 = arith.constant 0 : i32
    %c0_i32_2 = arith.constant 0 : i32
    return %c0_i32, %c0_i32_0, %c0_i32_1 : i32, i32, i32
  }
  func.func @transform_4(%arg0: i32) -> (i32, i32, i32) {
    %c0_i32 = arith.constant 0 : i32
    %c0_i32_0 = arith.constant 0 : i32
    %c0_i32_1 = arith.constant 0 : i32
    %c0_i32_2 = arith.constant 0 : i32
    return %c0_i32, %c0_i32_0, %c0_i32_1 : i32, i32, i32
  }
}

</mosaic_0001>

<llo_original>
// kernel: _attention_forward_nocache.1
$region0: #{_attention_forward_nocache.1}
  #allocation0 [shape = 'u32[]', space=smem, size = 0x4, offset = 0x4, fixed_abs, tag = 'smem constant byte address 0x4 - core index']
  #allocation1 [shape = 'u32[144,128]{1,0:T(1,128)}', space=vmem, size = 0x12000, scoped, tag = 'internal scratch']
  %s0 = inlined_call_operand.hbm [shape: f32[2,16,128], index: 0, kind: input, shape index: {}]
  %s1 = inlined_call_operand.hbm [shape: bf16[128,384], index: 1, kind: input, shape index: {}]
  %s2 = inlined_call_operand.hbm [shape: bf16[128,128], index: 2, kind: input, shape index: {}]
  %s3 = inlined_call_operand.hbm [shape: bf16[2,16,128], index: 3, kind: output, shape index: {0}]
  %s4 = inlined_call_operand.hbm [shape: bf16[2,16,256], index: 4, kind: output, shape index: {1}]
  %5 = xla_tuple %s3, %s4
  %s6 = sld [smem:[#allocation0]]
  $region42: #{_attention_forward_nocache.1} parent=0
    _
  %s8 = ssub.s32 1, %s6
  %s9 = scalar_select 0, %s8, %s6
  $region1: #{_attention_forward_nocache.1} parent=0
    #allocation2 [shape = 'u8[16384]{0}', space=vmem, size = 0x4000, scoped, tag = 'input window, operand 0, single buffered']
    #allocation3 [shape = 's32[1]{0}', space=sflag, size = 0x4, scoped, tag = 'scoped memory for _attention_forward_nocache.1']
    #allocation4 [shape = 's32[1]{0}', space=sflag, size = 0x4, scoped, tag = 'scoped memory for _attention_forward_nocache.1']
    #allocation5 [shape = 'u8[98304]{0}', space=vmem, size = 0x18000, scoped, tag = 'input window, operand 1, single buffered']
    #allocation6 [shape = 's32[1]{0}', space=sflag, size = 0x4, scoped, tag = 'scoped memory for _attention_forward_nocache.1']
    #allocation7 [shape = 'u8[32768]{0}', space=vmem, size = 0x8000, scoped, tag = 'input window, operand 2, single buffered']
    #allocation8 [shape = 'u8[8192]{0}', space=vmem, size = 0x2000, scoped, tag = 'output window, operand 0, single buffered']
    #allocation9 [shape = 'u8[16384]{0}', space=vmem, size = 0x4000, scoped, tag = 'output window, operand 1, single buffered']
    #allocation10 [shape = 's32[1]{0}', space=sflag, size = 0x4, scoped, tag = 'scoped memory for _attention_forward_nocache.1']
    %10 = vsyncpa [#allocation3], 0
    %11 = vsyncpa [#allocation6], 0
    %12 = vsyncpa [#allocation4], 0
    %13 = vsyncpa [#allocation10], 0
    // Predicated region
    $region2: #{_attention_forward_nocache.1} parent=1 // pred_check
      _
    $region3: #{_attention_forward_nocache.1} parent=1 // pred_check_branch
      %15 = sbr.rel (0) target = $region5
    $region4: #{_attention_forward_nocache.1} parent=1 // pred_region
      %s17 = ssub.s32 512, 512
      %18 = vsyncadd [#allocation3], %s17
      %s19 = sshll.u32 [#allocation2], 4
      %s20 = int_to_ptr.vmem [resolvable:$true] %s19
      %25 = dma.hbm_to_vmem [thread:$0]  %s0, 512, %s20, [#allocation3], 128, 128, 8
    $region5: #{_attention_forward_nocache.1} parent=1 // pred_fallthru
      _
    // Predicated region
    $region6: #{_attention_forward_nocache.1} parent=1 // pred_check
      _
    $region7: #{_attention_forward_nocache.1} parent=1 // pred_check_branch
      %27 = sbr.rel (0) target = $region9
    $region8: #{_attention_forward_nocache.1} parent=1 // pred_region
      %s29 = ssub.s32 3072, 3072
      %30 = vsyncadd [#allocation6], %s29
      %s31 = sshll.u32 [#allocation5], 4
      %s32 = int_to_ptr.vmem [resolvable:$true] %s31
      %37 = dma.hbm_to_vmem [thread:$0]  %s1, 3072, %s32, [#allocation6], 192, 192, 12
    $region9: #{_attention_forward_nocache.1} parent=1 // pred_fallthru
      _
    // Predicated region
    $region10: #{_attention_forward_nocache.1} parent=1 // pred_check
      _
    $region11: #{_attention_forward_nocache.1} parent=1 // pred_check_branch
      %39 = sbr.rel (0) target = $region13
    $region12: #{_attention_forward_nocache.1} parent=1 // pred_region
      %s41 = ssub.s32 1024, 1024
      %42 = vsyncadd [#allocation6], %s41
      %s43 = sshll.u32 [#allocation7], 4
      %s44 = int_to_ptr.vmem [resolvable:$true] %s43
      %49 = dma.hbm_to_vmem [thread:$0]  %s2, 1024, %s44, [#allocation6], 64, 64, 4
    $region13: #{_attention_forward_nocache.1} parent=1 // pred_fallthru
      _
    // Predicated region
    $region14: #{_attention_forward_nocache.1} parent=1 // pred_check
      _
    $region15: #{_attention_forward_nocache.1} parent=1 // pred_check_branch
      %51 = sbr.rel (0) target = $region17
    $region16: #{_attention_forward_nocache.1} parent=1 // pred_region
      %52 = dma.done [#allocation3], 512
    $region17: #{_attention_forward_nocache.1} parent=1 // pred_fallthru
      _
    // Predicated region
    $region18: #{_attention_forward_nocache.1} parent=1 // pred_check
      _
    $region19: #{_attention_forward_nocache.1} parent=1 // pred_check_branch
      %54 = sbr.rel (0) target = $region21
    $region20: #{_attention_forward_nocache.1} parent=1 // pred_region
      %55 = dma.done [#allocation6], 3072
    $region21: #{_attention_forward_nocache.1} parent=1 // pred_fallthru
      _
    // Predicated region
    $region22: #{_attention_forward_nocache.1} parent=1 // pred_check
      _
    $region23: #{_attention_forward_nocache.1} parent=1 // pred_check_branch
      %57 = sbr.rel (0) target = $region25
    $region24: #{_attention_forward_nocache.1} parent=1 // pred_region
      %58 = dma.done [#allocation6], 1024
    $region25: #{_attention_forward_nocache.1} parent=1 // pred_fallthru
      _
    %v60 = vld [vmem:[#allocation2] sm:$0xff]
    %v61 = vld [vmem:[#allocation2 + $0x8] sm:$0xff]
    %v62 = vld [vmem:[#allocation2 + $0x10] sm:$0xff]
    %v63 = vld [vmem:[#allocation2 + $0x18] sm:$0xff]
    %v64 = vpack.c.bf16 %v61, %v60
    %v65 = vpack.c.bf16 %v63, %v62
    %v66 = vld [vmem:[#allocation5] sm:$0xff]
    %v67 = vld [vmem:[#allocation5 + $0x8] sm:$0xf]
    %v68 = vld [vmem:[#allocation5 + $0xc] sm:$0xff]
    %v69 = vld [vmem:[#allocation5 + $0x14] sm:$0xf]
    %v70 = vld [vmem:[#allocation5 + $0x18] sm:$0xff]
    %v71 = vld [vmem:[#allocation5 + $0x20] sm:$0xf]
    %v72 = vld [vmem:[#allocation5 + $0x24] sm:$0xff]
    %v73 = vld [vmem:[#allocation5 + $0x2c] sm:$0xf]
    %v74 = vld [vmem:[#allocation5 + $0x30] sm:$0xff]
    %v75 = vld [vmem:[#allocation5 + $0x38] sm:$0xf]
    %v76 = vld [vmem:[#allocation5 + $0x3c] sm:$0xff]
    %v77 = vld [vmem:[#allocation5 + $0x44] sm:$0xf]
    %v78 = vld [vmem:[#allocation5 + $0x48] sm:$0xff]
    %v79 = vld [vmem:[#allocation5 + $0x50] sm:$0xf]
    %v80 = vld [vmem:[#allocation5 + $0x54] sm:$0xff]
    %v81 = vld [vmem:[#allocation5 + $0x5c] sm:$0xf]
    %v82 = vld [vmem:[#allocation5 + $0x60] sm:$0xff]
    %v83 = vld [vmem:[#allocation5 + $0x68] sm:$0xf]
    %v84 = vld [vmem:[#allocation5 + $0x6c] sm:$0xff]
    %v85 = vld [vmem:[#allocation5 + $0x74] sm:$0xf]
    %v86 = vld [vmem:[#allocation5 + $0x78] sm:$0xff]
    %v87 = vld [vmem:[#allocation5 + $0x80] sm:$0xf]
    %v88 = vld [vmem:[#allocation5 + $0x84] sm:$0xff]
    %v89 = vld [vmem:[#allocation5 + $0x8c] sm:$0xf]
    %v90 = vld [vmem:[#allocation5 + $0x90] sm:$0xff]
    %v91 = vld [vmem:[#allocation5 + $0x98] sm:$0xf]
    %v92 = vld [vmem:[#allocation5 + $0x9c] sm:$0xff]
    %v93 = vld [vmem:[#allocation5 + $0xa4] sm:$0xf]
    %v94 = vld [vmem:[#allocation5 + $0xa8] sm:$0xff]
    %v95 = vld [vmem:[#allocation5 + $0xb0] sm:$0xf]
    %v96 = vld [vmem:[#allocation5 + $0xb4] sm:$0xff]
    %v97 = vld [vmem:[#allocation5 + $0xbc] sm:$0xf]
    %v130 = vunpack.c.l.b16 %v66
    %v131 = vunpack.c.h.b16 %v66
    %v132 = vunpack.c.l.b16 %v67
    %v133 = vunpack.c.l.b16 %v68
    %v134 = vunpack.c.h.b16 %v68
    %v135 = vunpack.c.l.b16 %v69
    %v136 = vunpack.c.l.b16 %v70
    %v137 = vunpack.c.h.b16 %v70
    %v138 = vunpack.c.l.b16 %v71
    %v139 = vunpack.c.l.b16 %v72
    %v140 = vunpack.c.h.b16 %v72
    %v141 = vunpack.c.l.b16 %v73
    %v142 = vunpack.c.l.b16 %v74
    %v143 = vunpack.c.h.b16 %v74
    %v144 = vunpack.c.l.b16 %v75
    %v145 = vunpack.c.l.b16 %v76
    %v146 = vunpack.c.h.b16 %v76
    %v147 = vunpack.c.l.b16 %v77
    %v148 = vunpack.c.l.b16 %v78
    %v149 = vunpack.c.h.b16 %v78
    %v150 = vunpack.c.l.b16 %v79
    %v151 = vunpack.c.l.b16 %v80
    %v152 = vunpack.c.h.b16 %v80
    %v153 = vunpack.c.l.b16 %v81
    %v154 = vunpack.c.l.b16 %v82
    %v155 = vunpack.c.h.b16 %v82
    %v156 = vunpack.c.l.b16 %v83
    %v157 = vunpack.c.l.b16 %v84
    %v158 = vunpack.c.h.b16 %v84
    %v159 = vunpack.c.l.b16 %v85
    %v160 = vunpack.c.l.b16 %v86
    %v161 = vunpack.c.h.b16 %v86
    %v162 = vunpack.c.l.b16 %v87
    %v163 = vunpack.c.l.b16 %v88
    %v164 = vunpack.c.h.b16 %v88
    %v165 = vunpack.c.l.b16 %v89
    %v166 = vunpack.c.l.b16 %v90
    %v167 = vunpack.c.h.b16 %v90
    %v168 = vunpack.c.l.b16 %v91
    %v169 = vunpack.c.l.b16 %v92
    %v170 = vunpack.c.h.b16 %v92
    %v171 = vunpack.c.l.b16 %v93
    %v172 = vunpack.c.l.b16 %v94
    %v173 = vunpack.c.h.b16 %v94
    %v174 = vunpack.c.l.b16 %v95
    %v175 = vunpack.c.l.b16 %v96
    %v176 = vunpack.c.h.b16 %v96
    %v177 = vunpack.c.l.b16 %v97
    %v178 = vpack.c.b16 %v133, %v130
    %v179 = vpack.c.b16 %v134, %v131
    %v180 = vpack.c.b16 %v135, %v132
    %v181 = vpack.c.b16 %v139, %v136
    %v182 = vpack.c.b16 %v140, %v137
    %v183 = vpack.c.b16 %v141, %v138
    %v184 = vpack.c.b16 %v145, %v142
    %v185 = vpack.c.b16 %v146, %v143
    %v186 = vpack.c.b16 %v147, %v144
    %v187 = vpack.c.b16 %v151, %v148
    %v188 = vpack.c.b16 %v152, %v149
    %v189 = vpack.c.b16 %v153, %v150
    %v190 = vpack.c.b16 %v157, %v154
    %v191 = vpack.c.b16 %v158, %v155
    %v192 = vpack.c.b16 %v159, %v156
    %v193 = vpack.c.b16 %v163, %v160
    %v194 = vpack.c.b16 %v164, %v161
    %v195 = vpack.c.b16 %v165, %v162
    %v196 = vpack.c.b16 %v169, %v166
    %v197 = vpack.c.b16 %v170, %v167
    %v198 = vpack.c.b16 %v171, %v168
    %v199 = vpack.c.b16 %v175, %v172
    %v200 = vpack.c.b16 %v176, %v173
    %v201 = vpack.c.b16 %v177, %v174
    %226 = vmatprep.subr.bf16.mxu0 %v200
    %227 = vmatpush1.bf16.msra.mxu0 %v199
    %228 = vmatprep.subr.bf16.mxu0 %v197
    %229 = vmatpush1.bf16.msra.mxu0 %v196
    %230 = vmatprep.subr.bf16.mxu0 %v194
    %231 = vmatpush1.bf16.msra.mxu0 %v193
    %232 = vmatprep.subr.bf16.mxu0 %v191
    %233 = vmatpush1.bf16.msra.mxu0 %v190
    %234 = vmatprep.subr.bf16.mxu0 %v188
    %235 = vmatpush1.bf16.msra.mxu0 %v187
    %236 = vmatprep.subr.bf16.mxu0 %v185
    %237 = vmatpush1.bf16.msra.mxu0 %v184
    %238 = vmatprep.subr.bf16.mxu0 %v182
    %239 = vmatpush1.bf16.msra.mxu0 %v181
    %240 = vmatprep.subr.bf16.mxu0 %v179
    %241 = vmatpush1.bf16.msra.mxu0 %v178
    %242 = vmatprep.subr.bf16.mxu0 0
    %243 = vmatpush2.bf16.msra.mxu0 0
    %244 = vmatprep.subr.bf16.mxu0 0
    %245 = vmatpush2.bf16.msra.mxu0 0
    %246 = vmatprep.subr.bf16.mxu0 0
    %247 = vmatpush2.bf16.msra.mxu0 0
    %248 = vmatprep.subr.bf16.mxu0 0
    %249 = vmatpush2.bf16.msra.mxu0 0
    %250 = vmatprep.subr.bf16.mxu0 0
    %251 = vmatpush2.bf16.msra.mxu0 0
    %252 = vmatprep.subr.bf16.mxu0 0
    %253 = vmatpush2.bf16.msra.mxu0 0
    %254 = vmatprep.subr.bf16.mxu0 0
    %255 = vmatpush2.bf16.msra.mxu0 0
    %256 = vmatprep.subr.bf16.mxu0 0
    %257 = vmatpush2.bf16.msra.mxu0 0
    %258 = vmatprep.mubr.bf16.mxu0 0
    %259 = vmatmul.mubr.bf16.gmra.mxu0 %v64
    %v260 = vpop.f32.mrf.mxu0
    %v261 = vadd.f32 0.0, %v260
    %v262 = vpop.f32.mrf.mxu0
    %v263 = vadd.f32 0.0, %v262
    %v264 = vpop.f32.mrf.mxu0
    %v265 = vadd.f32 0.0, %v264
    %v266 = vpop.f32.mrf.mxu0
    %v267 = vadd.f32 0.0, %v266
    %268 = vmatprep.mubr.bf16.mxu0 0
    %269 = vmatmul.mubr.bf16.gmra.mxu0 %v65
    %v270 = vpop.f32.mrf.mxu0
    %v271 = vadd.f32 0.0, %v270
    %v272 = vpop.f32.mrf.mxu0
    %v273 = vadd.f32 0.0, %v272
    %v274 = vpop.f32.mrf.mxu0
    %v275 = vadd.f32 0.0, %v274
    %v276 = vpop.f32.mrf.mxu0
    %v277 = vadd.f32 0.0, %v276
    %278 = vdwg.mxu0
    %279 = vmatprep.subr.bf16.mxu0 0
    %280 = vmatpush1.bf16.msra.mxu0 %v201
    %281 = vmatprep.subr.bf16.mxu0 0
    %282 = vmatpush1.bf16.msra.mxu0 %v198
    %283 = vmatprep.subr.bf16.mxu0 0
    %284 = vmatpush1.bf16.msra.mxu0 %v195
    %285 = vmatprep.subr.bf16.mxu0 0
    %286 = vmatpush1.bf16.msra.mxu0 %v192
    %287 = vmatprep.subr.bf16.mxu0 0
    %288 = vmatpush1.bf16.msra.mxu0 %v189
    %289 = vmatprep.subr.bf16.mxu0 0
    %290 = vmatpush1.bf16.msra.mxu0 %v186
    %291 = vmatprep.subr.bf16.mxu0 0
    %292 = vmatpush1.bf16.msra.mxu0 %v183
    %293 = vmatprep.subr.bf16.mxu0 0
    %294 = vmatpush1.bf16.msra.mxu0 %v180
    %295 = vmatprep.subr.bf16.mxu0 0
    %296 = vmatpush2.bf16.msra.mxu0 0
    %297 = vmatprep.subr.bf16.mxu0 0
    %298 = vmatpush2.bf16.msra.mxu0 0
    %299 = vmatprep.subr.bf16.mxu0 0
    %300 = vmatpush2.bf16.msra.mxu0 0
    %301 = vmatprep.subr.bf16.mxu0 0
    %302 = vmatpush2.bf16.msra.mxu0 0
    %303 = vmatprep.subr.bf16.mxu0 0
    %304 = vmatpush2.bf16.msra.mxu0 0
    %305 = vmatprep.subr.bf16.mxu0 0
    %306 = vmatpush2.bf16.msra.mxu0 0
    %307 = vmatprep.subr.bf16.mxu0 0
    %308 = vmatpush2.bf16.msra.mxu0 0
    %309 = vmatprep.subr.bf16.mxu0 0
    %310 = vmatpush2.bf16.msra.mxu0 0
    %311 = vmatprep.mubr.bf16.mxu0 0
    %312 = vmatmul.mubr.bf16.gmra.mxu0 %v64
    %v313 = vpop.f32.mrf.mxu0
    %v314 = vadd.f32 0.0, %v313
    %v315 = vpop.f32.mrf.mxu0
    %v316 = vpop.f32.mrf.mxu0
    %v317 = vadd.f32 0.0, %v316
    %v318 = vpop.f32.mrf.mxu0
    %319 = vmatprep.mubr.bf16.mxu0 0
    %320 = vmatmul.mubr.bf16.gmra.mxu0 %v65
    %v321 = vpop.f32.mrf.mxu0
    %v322 = vadd.f32 0.0, %v321
    %v323 = vpop.f32.mrf.mxu0
    %v324 = vpop.f32.mrf.mxu0
    %v325 = vadd.f32 0.0, %v324
    %v326 = vpop.f32.mrf.mxu0
    %327 = vdwg.mxu0
    %v328 = vpack.c.bf16 %v265, %v261
    %v329 = vpack.c.bf16 %v275, %v271
    %v330 = vpack.c.bf16 %v267, %v263
    %v331 = vpack.c.bf16 %v277, %v273
    %v332 = vpack.c.bf16 %v317, %v314
    %v333 = vpack.c.bf16 %v325, %v322
    %v336 = vunpack.c.l.b16 %v330
    %v337 = vunpack.c.h.b16 %v330
    %v338 = vunpack.c.l.b16 %v331
    %v339 = vunpack.c.h.b16 %v331
    %v340 = vpack.c.b16 %v336, %v336
    %v341 = vpack.c.b16 %v337, %v337
    %v342 = vpack.c.b16 %v338, %v338
    %v343 = vpack.c.b16 %v339, %v339
    %348 = vst [vmem:[#allocation9] sm:$0xf] %v340
    %349 = vst [vmem:[#allocation9 + $0x8] sm:$0xf] %v341
    %350 = vst [vmem:[#allocation9 + $0x10] sm:$0xf] %v342
    %351 = vst [vmem:[#allocation9 + $0x18] sm:$0xf] %v343
    %v354 = vunpack.c.l.b16 %v332
    %v355 = vunpack.c.h.b16 %v332
    %v356 = vunpack.c.l.b16 %v333
    %v357 = vunpack.c.h.b16 %v333
    %v358 = vpack.c.b16 %v354, %v354
    %v359 = vpack.c.b16 %v355, %v355
    %v360 = vpack.c.b16 %v356, %v356
    %v361 = vpack.c.b16 %v357, %v357
    %366 = vst [vmem:[#allocation9 + $0x4] sm:$0xf] %v358
    %367 = vst [vmem:[#allocation9 + $0xc] sm:$0xf] %v359
    %368 = vst [vmem:[#allocation9 + $0x14] sm:$0xf] %v360
    %369 = vst [vmem:[#allocation9 + $0x1c] sm:$0xf] %v361
    %370 = vmatprep.subr.bf16.mxu0 0
    %371 = vmatpush1.bf16.xpose.msra.mxu0 0
    %372 = vmatprep.subr.bf16.mxu0 0
    %373 = vmatpush1.bf16.xpose.msra.mxu0 0
    %374 = vmatprep.subr.bf16.mxu0 0
    %375 = vmatpush1.bf16.xpose.msra.mxu0 0
    %376 = vmatprep.subr.bf16.mxu0 0
    %377 = vmatpush1.bf16.xpose.msra.mxu0 0
    %378 = vmatprep.subr.bf16.mxu0 0
    %379 = vmatpush1.bf16.xpose.msra.mxu0 0
    %380 = vmatprep.subr.bf16.mxu0 0
    %381 = vmatpush1.bf16.xpose.msra.mxu0 0
    %382 = vmatprep.subr.bf16.mxu0 0
    %383 = vmatpush1.bf16.xpose.msra.mxu0 0
    %384 = vmatprep.subr.bf16.mxu0 0
    %385 = vmatpush1.bf16.xpose.msra.mxu0 %v330
    %386 = vmatprep.subr.bf16.mxu0 0
    %387 = vmatpush2.bf16.xpose.msra.mxu0 0
    %388 = vmatprep.subr.bf16.mxu0 0
    %389 = vmatpush2.bf16.xpose.msra.mxu0 0
    %390 = vmatprep.subr.bf16.mxu0 0
    %391 = vmatpush2.bf16.xpose.msra.mxu0 0
    %392 = vmatprep.subr.bf16.mxu0 0
    %393 = vmatpush2.bf16.xpose.msra.mxu0 0
    %394 = vmatprep.subr.bf16.mxu0 0
    %395 = vmatpush2.bf16.xpose.msra.mxu0 0
    %396 = vmatprep.subr.bf16.mxu0 0
    %397 = vmatpush2.bf16.xpose.msra.mxu0 0
    %398 = vmatprep.subr.bf16.mxu0 0
    %399 = vmatpush2.bf16.xpose.msra.mxu0 0
    %400 = vmatprep.subr.bf16.mxu0 0
    %401 = vmatpush2.bf16.xpose.msra.mxu0 0
    %402 = vmatprep.mubr.bf16.mxu0 0
    %403 = vmatmul.mubr.bf16.gmra.mxu0 %v328
    %v404 = vpop.f32.mrf.mxu0
    %v405 = vadd.f32 0.0, %v404
    %v406 = vpop.f32.mrf.mxu0
    %v407 = vpop.f32.mrf.mxu0
    %v408 = vadd.f32 0.0, %v407
    %v409 = vpop.f32.mrf.mxu0
    %410 = vdwg.mxu0
    %411 = vmatprep.subr.bf16.mxu0 0
    %412 = vmatpush1.bf16.xpose.msra.mxu0 0
    %413 = vmatprep.subr.bf16.mxu0 0
    %414 = vmatpush1.bf16.xpose.msra.mxu0 0
    %415 = vmatprep.subr.bf16.mxu0 0
    %416 = vmatpush1.bf16.xpose.msra.mxu0 0
    %417 = vmatprep.subr.bf16.mxu0 0
    %418 = vmatpush1.bf16.xpose.msra.mxu0 0
    %419 = vmatprep.subr.bf16.mxu0 0
    %420 = vmatpush1.bf16.xpose.msra.mxu0 0
    %421 = vmatprep.subr.bf16.mxu0 0
    %422 = vmatpush1.bf16.xpose.msra.mxu0 0
    %423 = vmatprep.subr.bf16.mxu0 0
    %424 = vmatpush1.bf16.xpose.msra.mxu0 0
    %425 = vmatprep.subr.bf16.mxu0 0
    %426 = vmatpush1.bf16.xpose.msra.mxu0 %v331
    %427 = vmatprep.subr.bf16.mxu0 0
    %428 = vmatpush2.bf16.xpose.msra.mxu0 0
    %429 = vmatprep.subr.bf16.mxu0 0
    %430 = vmatpush2.bf16.xpose.msra.mxu0 0
    %431 = vmatprep.subr.bf16.mxu0 0
    %432 = vmatpush2.bf16.xpose.msra.mxu0 0
    %433 = vmatprep.subr.bf16.mxu0 0
    %434 = vmatpush2.bf16.xpose.msra.mxu0 0
    %435 = vmatprep.subr.bf16.mxu0 0
    %436 = vmatpush2.bf16.xpose.msra.mxu0 0
    %437 = vmatprep.subr.bf16.mxu0 0
    %438 = vmatpush2.bf16.xpose.msra.mxu0 0
    %439 = vmatprep.subr.bf16.mxu0 0
    %440 = vmatpush2.bf16.xpose.msra.mxu0 0
    %441 = vmatprep.subr.bf16.mxu0 0
    %442 = vmatpush2.bf16.xpose.msra.mxu0 0
    %443 = vmatprep.mubr.bf16.mxu0 0
    %444 = vmatmul.mubr.bf16.gmra.mxu0 %v329
    %v445 = vpop.f32.mrf.mxu0
    %v446 = vadd.f32 0.0, %v445
    %v447 = vpop.f32.mrf.mxu0
    %v448 = vpop.f32.mrf.mxu0
    %v449 = vadd.f32 0.0, %v448
    %v450 = vpop.f32.mrf.mxu0
    %451 = vdwg.mxu0
    %v452 = vlaneseq
    %v453 = vshrl.u32 %v452, 7
    %v454 = vadd.s32 %v453, 8
    %v455 = vlaneseq
    %v456 = vand.u32 %v455, 127
    %vm457 = vcmp.le.s32.totalorder %v456, %v453
    %vm458 = vcmp.le.s32.totalorder %v456, %v454
    %v459 = vsel %vm457, %v405, -1e+30
    %v460 = vsel %vm458, %v408, -1e+30
    %v461 = vsel %vm457, %v446, -1e+30
    %v462 = vsel %vm458, %v449, -1e+30
    %vm463 = vcmask 130048
    %v464 = vsel %vm463, %v459, -inf
    %465 = vmax.xlane.f32.xlu0 %v464
    %v466 = vpop.xlane.xlu0 %465
    %v467 = vsel %vm463, %v460, -inf
    %468 = vmax.xlane.f32.xlu0 %v467
    %v469 = vpop.xlane.xlu0 %468
    %v470 = vsel %vm463, %v461, -inf
    %471 = vmax.xlane.f32.xlu0 %v470
    %v472 = vpop.xlane.xlu0 %471
    %v473 = vsel %vm463, %v462, -inf
    %474 = vmax.xlane.f32.xlu0 %v473
    %v475 = vpop.xlane.xlu0 %474
    %v476 = vsub.f32 %v459, %v466
    %v477 = vsub.f32 %v460, %v469
    %v478 = vsub.f32 %v461, %v472
    %v479 = vsub.f32 %v462, %v475
    %v480 = vmul.f32 %v476, 1.442695
    %v481 = vpow.pop %v480
    %v482 = vmul.f32 %v477, 1.442695
    %v483 = vpow.pop %v482
    %v484 = vmul.f32 %v478, 1.442695
    %v485 = vpow.pop %v484
    %v486 = vmul.f32 %v479, 1.442695
    %v487 = vpow.pop %v486
    %v488 = vsel %vm463, %v481, 0.0
    %489 = vadd.xlane.f32.xlu0 %v488
    %v490 = vpop.xlane.xlu0 %489
    %v491 = vsel %vm463, %v483, 0.0
    %492 = vadd.xlane.f32.xlu0 %v491
    %v493 = vpop.xlane.xlu0 %492
    %v494 = vsel %vm463, %v485, 0.0
    %495 = vadd.xlane.f32.xlu0 %v494
    %v496 = vpop.xlane.xlu0 %495
    %v497 = vsel %vm463, %v487, 0.0
    %498 = vadd.xlane.f32.xlu0 %v497
    %v499 = vpop.xlane.xlu0 %498
    %v500 = vpack.c.bf16 %v483, %v481
    %v501 = vpack.c.bf16 %v487, %v485
    %v503 = vsel %vm463, %v500, 0
    %505 = vmatprep.subr.bf16.mxu0 0
    %506 = vmatpush1.bf16.msra.mxu0 0
    %507 = vmatprep.subr.bf16.mxu0 0
    %508 = vmatpush1.bf16.msra.mxu0 0
    %509 = vmatprep.subr.bf16.mxu0 0
    %510 = vmatpush1.bf16.msra.mxu0 0
    %511 = vmatprep.subr.bf16.mxu0 0
    %512 = vmatpush1.bf16.msra.mxu0 0
    %513 = vmatprep.subr.bf16.mxu0 0
    %514 = vmatpush1.bf16.msra.mxu0 0
    %515 = vmatprep.subr.bf16.mxu0 0
    %516 = vmatpush1.bf16.msra.mxu0 0
    %517 = vmatprep.subr.bf16.mxu0 0
    %518 = vmatpush1.bf16.msra.mxu0 0
    %519 = vmatprep.subr.bf16.mxu0 0
    %520 = vmatpush1.bf16.msra.mxu0 %v332
    %521 = vmatprep.subr.bf16.mxu0 0
    %522 = vmatpush2.bf16.msra.mxu0 0
    %523 = vmatprep.subr.bf16.mxu0 0
    %524 = vmatpush2.bf16.msra.mxu0 0
    %525 = vmatprep.subr.bf16.mxu0 0
    %526 = vmatpush2.bf16.msra.mxu0 0
    %527 = vmatprep.subr.bf16.mxu0 0
    %528 = vmatpush2.bf16.msra.mxu0 0
    %529 = vmatprep.subr.bf16.mxu0 0
    %530 = vmatpush2.bf16.msra.mxu0 0
    %531 = vmatprep.subr.bf16.mxu0 0
    %532 = vmatpush2.bf16.msra.mxu0 0
    %533 = vmatprep.subr.bf16.mxu0 0
    %534 = vmatpush2.bf16.msra.mxu0 0
    %535 = vmatprep.subr.bf16.mxu0 0
    %536 = vmatpush2.bf16.msra.mxu0 0
    %537 = vmatprep.mubr.bf16.mxu0 0
    %538 = vmatmul.mubr.bf16.gmra.mxu0 %v503
    %v539 = vpop.f32.mrf.mxu0
    %v540 = vadd.f32 0.0, %v539
    %v541 = vpop.f32.mrf.mxu0
    %v542 = vpop.f32.mrf.mxu0
    %v543 = vadd.f32 0.0, %v542
    %v544 = vpop.f32.mrf.mxu0
    %545 = vdwg.mxu0
    %v547 = vsel %vm463, %v501, 0
    %549 = vmatprep.subr.bf16.mxu0 0
    %550 = vmatpush1.bf16.msra.mxu0 0
    %551 = vmatprep.subr.bf16.mxu0 0
    %552 = vmatpush1.bf16.msra.mxu0 0
    %553 = vmatprep.subr.bf16.mxu0 0
    %554 = vmatpush1.bf16.msra.mxu0 0
    %555 = vmatprep.subr.bf16.mxu0 0
    %556 = vmatpush1.bf16.msra.mxu0 0
    %557 = vmatprep.subr.bf16.mxu0 0
    %558 = vmatpush1.bf16.msra.mxu0 0
    %559 = vmatprep.subr.bf16.mxu0 0
    %560 = vmatpush1.bf16.msra.mxu0 0
    %561 = vmatprep.subr.bf16.mxu0 0
    %562 = vmatpush1.bf16.msra.mxu0 0
    %563 = vmatprep.subr.bf16.mxu0 0
    %564 = vmatpush1.bf16.msra.mxu0 %v333
    %565 = vmatprep.subr.bf16.mxu0 0
    %566 = vmatpush2.bf16.msra.mxu0 0
    %567 = vmatprep.subr.bf16.mxu0 0
    %568 = vmatpush2.bf16.msra.mxu0 0
    %569 = vmatprep.subr.bf16.mxu0 0
    %570 = vmatpush2.bf16.msra.mxu0 0
    %571 = vmatprep.subr.bf16.mxu0 0
    %572 = vmatpush2.bf16.msra.mxu0 0
    %573 = vmatprep.subr.bf16.mxu0 0
    %574 = vmatpush2.bf16.msra.mxu0 0
    %575 = vmatprep.subr.bf16.mxu0 0
    %576 = vmatpush2.bf16.msra.mxu0 0
    %577 = vmatprep.subr.bf16.mxu0 0
    %578 = vmatpush2.bf16.msra.mxu0 0
    %579 = vmatprep.subr.bf16.mxu0 0
    %580 = vmatpush2.bf16.msra.mxu0 0
    %581 = vmatprep.mubr.bf16.mxu0 0
    %582 = vmatmul.mubr.bf16.gmra.mxu0 %v547
    %v583 = vpop.f32.mrf.mxu0
    %v584 = vadd.f32 0.0, %v583
    %v585 = vpop.f32.mrf.mxu0
    %v586 = vpop.f32.mrf.mxu0
    %v587 = vadd.f32 0.0, %v586
    %v588 = vpop.f32.mrf.mxu0
    %589 = vdwg.mxu0
    %v590 = vrcp.pop %v490
    %v591 = vrcp.pop %v493
    %v592 = vrcp.pop %v496
    %v593 = vrcp.pop %v499
    %v594 = vmul.f32 %v540, %v590
    %v595 = vmul.f32 %v543, %v591
    %v596 = vmul.f32 %v584, %v592
    %v597 = vmul.f32 %v587, %v593
    %v598 = vpack.c.bf16 %v595, %v594
    %v599 = vpack.c.bf16 %v597, %v596
    %v600 = vld [vmem:[#allocation7] sm:$0xf]
    %v601 = vld [vmem:[#allocation7 + $0x4] sm:$0xf]
    %v602 = vld [vmem:[#allocation7 + $0x8] sm:$0xf]
    %v603 = vld [vmem:[#allocation7 + $0xc] sm:$0xf]
    %v604 = vld [vmem:[#allocation7 + $0x10] sm:$0xf]
    %v605 = vld [vmem:[#allocation7 + $0x14] sm:$0xf]
    %v606 = vld [vmem:[#allocation7 + $0x18] sm:$0xf]
    %v607 = vld [vmem:[#allocation7 + $0x1c] sm:$0xf]
    %v608 = vld [vmem:[#allocation7 + $0x20] sm:$0xf]
    %v609 = vld [vmem:[#allocation7 + $0x24] sm:$0xf]
    %v610 = vld [vmem:[#allocation7 + $0x28] sm:$0xf]
    %v611 = vld [vmem:[#allocation7 + $0x2c] sm:$0xf]
    %v612 = vld [vmem:[#allocation7 + $0x30] sm:$0xf]
    %v613 = vld [vmem:[#allocation7 + $0x34] sm:$0xf]
    %v614 = vld [vmem:[#allocation7 + $0x38] sm:$0xf]
    %v615 = vld [vmem:[#allocation7 + $0x3c] sm:$0xf]
    %v632 = vunpack.c.l.b16 %v600
    %v633 = vunpack.c.l.b16 %v601
    %v634 = vunpack.c.l.b16 %v602
    %v635 = vunpack.c.l.b16 %v603
    %v636 = vunpack.c.l.b16 %v604
    %v637 = vunpack.c.l.b16 %v605
    %v638 = vunpack.c.l.b16 %v606
    %v639 = vunpack.c.l.b16 %v607
    %v640 = vunpack.c.l.b16 %v608
    %v641 = vunpack.c.l.b16 %v609
    %v642 = vunpack.c.l.b16 %v610
    %v643 = vunpack.c.l.b16 %v611
    %v644 = vunpack.c.l.b16 %v612
    %v645 = vunpack.c.l.b16 %v613
    %v646 = vunpack.c.l.b16 %v614
    %v647 = vunpack.c.l.b16 %v615
    %v648 = vpack.c.b16 %v633, %v632
    %v649 = vpack.c.b16 %v635, %v634
    %v650 = vpack.c.b16 %v637, %v636
    %v651 = vpack.c.b16 %v639, %v638
    %v652 = vpack.c.b16 %v641, %v640
    %v653 = vpack.c.b16 %v643, %v642
    %v654 = vpack.c.b16 %v645, %v644
    %v655 = vpack.c.b16 %v647, %v646
    %664 = vmatprep.subr.bf16.mxu0 0
    %665 = vmatpush1.bf16.msra.mxu0 %v655
    %666 = vmatprep.subr.bf16.mxu0 0
    %667 = vmatpush1.bf16.msra.mxu0 %v654
    %668 = vmatprep.subr.bf16.mxu0 0
    %669 = vmatpush1.bf16.msra.mxu0 %v653
    %670 = vmatprep.subr.bf16.mxu0 0
    %671 = vmatpush1.bf16.msra.mxu0 %v652
    %672 = vmatprep.subr.bf16.mxu0 0
    %673 = vmatpush1.bf16.msra.mxu0 %v651
    %674 = vmatprep.subr.bf16.mxu0 0
    %675 = vmatpush1.bf16.msra.mxu0 %v650
    %676 = vmatprep.subr.bf16.mxu0 0
    %677 = vmatpush1.bf16.msra.mxu0 %v649
    %678 = vmatprep.subr.bf16.mxu0 0
    %679 = vmatpush1.bf16.msra.mxu0 %v648
    %680 = vmatprep.subr.bf16.mxu0 0
    %681 = vmatpush2.bf16.msra.mxu0 0
    %682 = vmatprep.subr.bf16.mxu0 0
    %683 = vmatpush2.bf16.msra.mxu0 0
    %684 = vmatprep.subr.bf16.mxu0 0
    %685 = vmatpush2.bf16.msra.mxu0 0
    %686 = vmatprep.subr.bf16.mxu0 0
    %687 = vmatpush2.bf16.msra.mxu0 0
    %688 = vmatprep.subr.bf16.mxu0 0
    %689 = vmatpush2.bf16.msra.mxu0 0
    %690 = vmatprep.subr.bf16.mxu0 0
    %691 = vmatpush2.bf16.msra.mxu0 0
    %692 = vmatprep.subr.bf16.mxu0 0
    %693 = vmatpush2.bf16.msra.mxu0 0
    %694 = vmatprep.subr.bf16.mxu0 0
    %695 = vmatpush2.bf16.msra.mxu0 0
    %696 = vmatprep.mubr.bf16.mxu0 0
    %697 = vmatmul.mubr.bf16.gmra.mxu0 %v598
    %v698 = vpop.f32.mrf.mxu0
    %v699 = vadd.f32 0.0, %v698
    %v700 = vpop.f32.mrf.mxu0
    %v701 = vpop.f32.mrf.mxu0
    %v702 = vadd.f32 0.0, %v701
    %v703 = vpop.f32.mrf.mxu0
    %704 = vmatprep.mubr.bf16.mxu0 0
    %705 = vmatmul.mubr.bf16.gmra.mxu0 %v599
    %v706 = vpop.f32.mrf.mxu0
    %v707 = vadd.f32 0.0, %v706
    %v708 = vpop.f32.mrf.mxu0
    %v709 = vpop.f32.mrf.mxu0
    %v710 = vadd.f32 0.0, %v709
    %v711 = vpop.f32.mrf.mxu0
    %712 = vdwg.mxu0
    %v713 = vpack.c.bf16 %v702, %v699
    %v714 = vpack.c.bf16 %v710, %v707
    %v717 = vunpack.c.l.b16 %v713
    %v718 = vunpack.c.h.b16 %v713
    %v719 = vunpack.c.l.b16 %v714
    %v720 = vunpack.c.h.b16 %v714
    %v721 = vpack.c.b16 %v717, %v717
    %v722 = vpack.c.b16 %v718, %v718
    %v723 = vpack.c.b16 %v719, %v719
    %v724 = vpack.c.b16 %v720, %v720
    %729 = vst [vmem:[#allocation8] sm:$0xf] %v721
    %730 = vst [vmem:[#allocation8 + $0x4] sm:$0xf] %v722
    %731 = vst [vmem:[#allocation8 + $0x8] sm:$0xf] %v723
    %732 = vst [vmem:[#allocation8 + $0xc] sm:$0xf] %v724
    // Predicated region
    $region26: #{_attention_forward_nocache.1} parent=1 // pred_check
      _
    $region27: #{_attention_forward_nocache.1} parent=1 // pred_check_branch
      %734 = sbr.rel (0) target = $region29
    $region28: #{_attention_forward_nocache.1} parent=1 // pred_region
      %s736 = ssub.s32 256, 256
      %737 = vsyncadd [#allocation4], %s736
      %s738 = sshll.u32 [#allocation8], 4
      %s739 = int_to_ptr.vmem [resolvable:$true] %s738
      %744 = dma.vmem_to_hbm [thread:$0]  %s739, 256, %s3, [#allocation4], 64, 64, 4
    $region29: #{_attention_forward_nocache.1} parent=1 // pred_fallthru
      _
    // Predicated region
    $region30: #{_attention_forward_nocache.1} parent=1 // pred_check
      _
    $region31: #{_attention_forward_nocache.1} parent=1 // pred_check_branch
      %746 = sbr.rel (0) target = $region33
    $region32: #{_attention_forward_nocache.1} parent=1 // pred_region
      %s748 = ssub.s32 512, 512
      %749 = vsyncadd [#allocation10], %s748
      %s750 = sshll.u32 [#allocation9], 4
      %s751 = int_to_ptr.vmem [resolvable:$true] %s750
      %756 = dma.vmem_to_hbm [thread:$0]  %s751, 512, %s4, [#allocation10], 128, 128, 8
    $region33: #{_attention_forward_nocache.1} parent=1 // pred_fallthru
      _
    // Predicated region
    $region34: #{_attention_forward_nocache.1} parent=1 // pred_check
      _
    $region35: #{_attention_forward_nocache.1} parent=1 // pred_check_branch
      %758 = sbr.rel (0) target = $region37
    $region36: #{_attention_forward_nocache.1} parent=1 // pred_region
      %759 = dma.done [#allocation4], 256
    $region37: #{_attention_forward_nocache.1} parent=1 // pred_fallthru
      _
    // Predicated region
    $region38: #{_attention_forward_nocache.1} parent=1 // pred_check
      _
    $region39: #{_attention_forward_nocache.1} parent=1 // pred_check_branch
      %761 = sbr.rel (0) target = $region41
    $region40: #{_attention_forward_nocache.1} parent=1 // pred_region
      %762 = dma.done [#allocation10], 512
    $region41: #{_attention_forward_nocache.1} parent=1 // pred_fallthru
      _
    %763 = vsyncpa [#allocation3], 1
    %764 = vsyncpa [#allocation6], 1
    %765 = vsyncpa [#allocation4], 1
    %766 = vsyncpa [#allocation10], 1

</llo_original>
